<compile_context>
chip_gen: v7x
topology: tpu7x:2x2x1
jax: 0.10.0
libtpu: 0.0.40
codegen_flags: <defaults>
</compile_context>

<pallas_src>
import functools

import jax
import jax.numpy as jnp
from jax.experimental import pallas as pl
from jax.experimental.pallas import tpu as pltpu


def _round_up(v, m):
    return (v + m - 1) // m * m


# --------------------------------------------------------------------------
# Kernel
# --------------------------------------------------------------------------
def _ensemble_kernel(*refs, n_crops, n_pad, kp, n_halves, scale):
    """refs = [crop_0 ... crop_{n_crops-1}, w_pad, b_pad, out]."""
    crop_refs = refs[:n_crops]
    w_ref = refs[n_crops]
    b_ref = refs[n_crops + 1]
    out_ref = refs[n_crops + 2]

    # Stack all crops in VMEM (each piece is 16 sublanes of bf16 -> aligned
    # sublane concat, no repack) and run ONE MXU matmul covering every crop
    # and both (unflipped / flip-folded) classifier halves.
    lhs = jnp.concatenate([r[...] for r in crop_refs], axis=0)   # (n_crops*n_pad, F) bf16
    logits = jnp.dot(lhs, w_ref[...], preferred_element_type=jnp.float32)
    logits = logits + b_ref[...]                                 # f32 (M, n_halves*kp)

    # Per-half numerically-stable softmax over the lane-padded class axis.
    # Padded classes carry bias -1e30, so exp() is exactly 0 in f32.
    p_sum = None
    for h in range(n_halves):                                    # static: 1 or 2
        l = logits[:, h * kp:(h + 1) * kp]                       # 128-lane aligned slice
        m = jnp.max(l, axis=-1, keepdims=True)
        e = jnp.exp(l - m)
        d = jnp.sum(e, axis=-1, keepdims=True)
        r = pl.reciprocal(d, approx=True)                        # EUP slot
        r = r * (2.0 - d * r)                                    # one Newton step (~free)
        p = e * r
        p_sum = p if p_sum is None else p_sum + p

    # Sum over crops: rows are grouped [crop0 | crop1 | ...], each n_pad tall
    # (n_pad is a multiple of 16 -> tile-aligned static slices), fully unrolled.
    acc = p_sum[0:n_pad, :]
    for i in range(1, n_crops):
        acc = acc + p_sum[i * n_pad:(i + 1) * n_pad, :]

    out_ref[...] = acc * jnp.float32(scale)                      # folds 1/n_terms


# --------------------------------------------------------------------------
# One-time parameter packing (hoisted out of the per-forward path)
# --------------------------------------------------------------------------
def pack_classifier_params(w, b, *, channels, cropsize, img_w, flipping=True):
    """Packs (w, b) once: flip-fold permutation, class padding, bf16 cast."""
    F, K = w.shape
    cs = cropsize
    # The 5 crops of the horizontally flipped image are exactly the W-reversed
    # original crop windows iff (W - cs) is even; then the flip folds into a
    # row-permuted weight copy concatenated as extra output columns.
    fold_flip = flipping and ((img_w - cs) % 2 == 0)
    kp = _round_up(max(K, 1), 128)

    w = w.astype(jnp.float32)
    b = b.astype(jnp.float32).reshape(1, K)
    halves = [w]
    if fold_flip:
        # Row permutation such that  crop @ w_flip == flip_W(crop) @ w.
        perm = jnp.arange(F).reshape(channels, cs, cs)[:, :, ::-1].reshape(-1)
        halves.append(w[perm, :])
    w_pad = jnp.concatenate(
        [jnp.pad(wh, ((0, 0), (0, kp - K))) for wh in halves], axis=1)
    b_half = jnp.pad(b, ((0, 0), (0, kp - K)), constant_values=-1e30)
    b_pad = jnp.concatenate([b_half] * len(halves), axis=1)

    return {
        # bf16 RHS: MXU-native on all gens, halves the dominant operand bytes.
        "w_pad": w_pad.astype(jnp.bfloat16),    # (F, n_halves*kp) bf16
        "b_pad": b_pad,                         # (1, n_halves*kp) f32
        "kp": kp,
        "n_classes": K,
        "n_halves": len(halves),
        "fold_flip": fold_flip,
    }


# --------------------------------------------------------------------------
# Forward (mirrors MultiCropEnsemble.forward with linear+softmax internals)
# --------------------------------------------------------------------------
@functools.partial(
    jax.jit,
    static_argnames=("cropsize", "kp", "n_classes", "n_halves", "fold_flip",
                     "flipping"))
def multi_crop_ensemble(x, w_pad, b_pad, *, cropsize, kp, n_classes, n_halves,
                        fold_flip, flipping=True):
    """x: (N, C, H, W); w_pad/b_pad: from pack_classifier_params."""
    N, C, H, W = x.shape
    cs = cropsize
    assert H >= cs and W >= cs
    F = C * cs * cs

    x1, x2, cx = 0, H - cs, H // 2 - cs // 2
    y1, y2, cy = 0, W - cs, W // 2 - cs // 2
    coords = [(x1, y1), (x1, y2), (x2, y1), (x2, y2), (cx, cy)]

    # bf16 LHS for the MXU; batch rows padded to 16 sublanes (bf16 packing) so
    # the in-kernel sublane concat / per-crop row slices stay tile-aligned.
    n_pad = _round_up(max(N, 1), 16)

    xb = x.astype(jnp.bfloat16)
    imgs = [xb]
    if flipping and not fold_flip:
        # TODO(synk): rare path ((W - cs) odd) — flip can't be folded into the
        # weights, so the flipped image's crops become extra LHS rows instead.
        imgs.append(xb[:, :, :, ::-1])

    crops = []
    for img in imgs:
        for hx, wy in coords:
            c = img[:, :, hx:hx + cs, wy:wy + cs].reshape(N, F)
            if n_pad != N:
                c = jnp.pad(c, ((0, n_pad - N), (0, 0)))
            crops.append(c)
    n_crops = len(crops)
    n_terms = n_crops * n_halves            # 10 (flipping) or 5

    kernel = functools.partial(
        _ensemble_kernel, n_crops=n_crops, n_pad=n_pad, kp=kp,
        n_halves=n_halves, scale=1.0 / float(n_terms))

    # Whole-problem-in-VMEM, single invocation: crops + weights are ~100 KiB
    # here, so no grid / pipelining is needed.
    # TODO(synk): at real scale (F ~ 1e5, K ~ 1e3) add a grid over M/batch
    # (mark it "parallel" so v7x's 2nd TensorCore is used) and the F
    # contraction ("arbitrary"); size tk for v7x's 64 MiB VMEM
    # (2*tk*n_halves*kp*2B W double-buffer + 2*tm*tk*2B LHS + 4*tm*n_halves*kp
    # f32 acc <= ~40-48 MiB -> tk~2048 on v7x vs ~4096-8192 on v5e/v6e) and set
    # pltpu.CompilerParams(vmem_limit_bytes=...) above the 16/32 MiB defaults.
    out = pl.pallas_call(
        kernel,
        out_shape=jax.ShapeDtypeStruct((n_pad, kp), jnp.float32),
        in_specs=[pl.BlockSpec(memory_space=pltpu.MemorySpace.VMEM)]
                 * (n_crops + 2),
        out_specs=pl.BlockSpec(memory_space=pltpu.MemorySpace.VMEM),
    )(*crops, w_pad, b_pad)

    return out[:N, :n_classes]


# --------------------------------------------------------------------------
# Pure-JAX reference mirroring the PyTorch forward
# --------------------------------------------------------------------------
def _reference(x, w, b, cropsize, flipping=True):
    N, C, H, W = x.shape
    cs = cropsize
    x1, x2, cx = 0, H - cs, H // 2 - cs // 2
    y1, y2, cy = 0, W - cs, W // 2 - cs // 2

    def get_output(xc):
        logits = xc.reshape(N, -1) @ w + b
        return jax.nn.softmax(logits, axis=1)

    def five(img):
        y = get_output(img[:, :, x1:x1 + cs, y1:y1 + cs])
        y = get_output(img[:, :, x1:x1 + cs, y2:y2 + cs]) + y
        y = get_output(img[:, :, x2:x2 + cs, y1:y1 + cs]) + y
        y = get_output(img[:, :, x2:x2 + cs, y2:y2 + cs]) + y
        y = get_output(img[:, :, cx:cx + cs, cy:cy + cs]) + y
        return y

    y = five(x)
    if flipping:
        y = y + five(x[:, :, :, ::-1])
        return y / 10.0
    return y / 5.0


if __name__ == "__main__":
    # Small shapes consistent with the module: NCHW input, crop smaller than H/W.
    N, C, H, W = 2, 4, 16, 16
    cropsize = 8
    num_classes = 16
    F = C * cropsize * cropsize

    key = jax.random.PRNGKey(0)
    kx, kw, kb = jax.random.split(key, 3)
    x = jax.random.normal(kx, (N, C, H, W), dtype=jnp.float32)
    w = jax.random.normal(kw, (F, num_classes), dtype=jnp.float32) * 0.02
    b = jax.random.normal(kb, (1, num_classes), dtype=jnp.float32) * 0.01

    # One-time packing (hoisted out of the per-forward path; reused every call).
    packed = pack_classifier_params(w, b, channels=C, cropsize=cropsize,
                                    img_w=W, flipping=True)
    w_pad = jax.block_until_ready(packed["w_pad"])
    b_pad = jax.block_until_ready(packed["b_pad"])

    out = multi_crop_ensemble(
        x, w_pad, b_pad, cropsize=cropsize, kp=packed["kp"],
        n_classes=packed["n_classes"], n_halves=packed["n_halves"],
        fold_flip=packed["fold_flip"], flipping=True)
    out = jax.block_until_ready(out)

    ref = _reference(x, w, b, cropsize, flipping=True)
    assert out.shape == (N, num_classes)
    # Tolerance 2e-3: bf16 matmul operands + approx-reciprocal (with one
    # Newton refinement step) — well within it for softmax-probability outputs.
    assert jnp.allclose(out, ref, atol=2e-3, rtol=2e-3), "mismatch vs reference"

    print("KERNEL_OK")
</pallas_src>

<mosaic_0001>
module attributes {stable_mosaic.version = 11 : i64} {
  func.func @_ensemble_kernel(%arg0: memref<16x256xbf16, #tpu.memory_space<vmem>>, %arg1: memref<16x256xbf16, #tpu.memory_space<vmem>>, %arg2: memref<16x256xbf16, #tpu.memory_space<vmem>>, %arg3: memref<16x256xbf16, #tpu.memory_space<vmem>>, %arg4: memref<16x256xbf16, #tpu.memory_space<vmem>>, %arg5: memref<256x256xbf16, #tpu.memory_space<vmem>>, %arg6: memref<1x256xf32, #tpu.memory_space<vmem>>, %arg7: memref<16x128xf32, #tpu.memory_space<vmem>>) attributes {dimension_semantics = [], scalar_prefetch = 0 : i64, scratch_operands = 0 : i64, tpu.core_type = #tpu.core_type<tc>} {
    %c0 = arith.constant 0 : index
    %c0_0 = arith.constant 0 : index
    %0 = vector.load %arg0[%c0, %c0_0] : memref<16x256xbf16, #tpu.memory_space<vmem>>, vector<16x256xbf16>
    %c0_1 = arith.constant 0 : index
    %c0_2 = arith.constant 0 : index
    %1 = vector.load %arg1[%c0_1, %c0_2] : memref<16x256xbf16, #tpu.memory_space<vmem>>, vector<16x256xbf16>
    %c0_3 = arith.constant 0 : index
    %c0_4 = arith.constant 0 : index
    %2 = vector.load %arg2[%c0_3, %c0_4] : memref<16x256xbf16, #tpu.memory_space<vmem>>, vector<16x256xbf16>
    %c0_5 = arith.constant 0 : index
    %c0_6 = arith.constant 0 : index
    %3 = vector.load %arg3[%c0_5, %c0_6] : memref<16x256xbf16, #tpu.memory_space<vmem>>, vector<16x256xbf16>
    %c0_7 = arith.constant 0 : index
    %c0_8 = arith.constant 0 : index
    %4 = vector.load %arg4[%c0_7, %c0_8] : memref<16x256xbf16, #tpu.memory_space<vmem>>, vector<16x256xbf16>
    %5 = tpu.concatenate %0, %1, %2, %3, %4 in 0 : vector<16x256xbf16>, vector<16x256xbf16>, vector<16x256xbf16>, vector<16x256xbf16>, vector<16x256xbf16> -> vector<80x256xbf16>
    %c0_9 = arith.constant 0 : index
    %c0_10 = arith.constant 0 : index
    %6 = vector.load %arg5[%c0_9, %c0_10] : memref<256x256xbf16, #tpu.memory_space<vmem>>, vector<256x256xbf16>
    %cst = arith.constant dense<0.000000e+00> : vector<80x256xf32>
    %7 = tpu.matmul %5, %6, %cst {dimension_numbers = #tpu.dot_dimension_numbers<[1], [0], [0], [1], [0, 0, 1, 1], [], []>} : vector<80x256xbf16>, vector<256x256xbf16>, vector<80x256xf32> -> vector<80x256xf32>
    %c0_11 = arith.constant 0 : index
    %c0_12 = arith.constant 0 : index
    %8 = vector.load %arg6[%c0_11, %c0_12] : memref<1x256xf32, #tpu.memory_space<vmem>>, vector<1x256xf32>
    %9 = vector.broadcast %8 : vector<1x256xf32> to vector<80x256xf32>
    %10 = arith.addf %7, %9 : vector<80x256xf32>
    %11 = vector.extract_strided_slice %10 {offsets = [0, 0], sizes = [80, 128], strides = [1, 1]} : vector<80x256xf32> to vector<80x128xf32>
    %cst_13 = arith.constant dense<0xFF800000> : vector<80xf32>
    %12 = vector.multi_reduction <maximumf>, %11, %cst_13 [1] : vector<80x128xf32> to vector<80xf32>
    %13 = vector.shape_cast %12 : vector<80xf32> to vector<80x1xf32>
    %14 = vector.broadcast %13 : vector<80x1xf32> to vector<80x128xf32>
    %15 = arith.subf %11, %14 : vector<80x128xf32>
    %16 = math.exp %15 : vector<80x128xf32>
    %cst_14 = arith.constant dense<0.000000e+00> : vector<80xf32>
    %17 = vector.multi_reduction <add>, %16, %cst_14 [1] : vector<80x128xf32> to vector<80xf32>
    %18 = vector.shape_cast %17 : vector<80xf32> to vector<80x1xf32>
    %19 = tpu.reciprocal %18 {approx = true} : vector<80x1xf32> -> vector<80x1xf32>
    %20 = arith.mulf %18, %19 : vector<80x1xf32>
    %cst_15 = arith.constant 2.000000e+00 : f32
    %21 = vector.broadcast %cst_15 : f32 to vector<80x1xf32>
    %22 = arith.subf %21, %20 : vector<80x1xf32>
    %23 = arith.mulf %19, %22 : vector<80x1xf32>
    %24 = vector.broadcast %23 : vector<80x1xf32> to vector<80x128xf32>
    %25 = arith.mulf %16, %24 : vector<80x128xf32>
    %26 = vector.extract_strided_slice %10 {offsets = [0, 128], sizes = [80, 128], strides = [1, 1]} : vector<80x256xf32> to vector<80x128xf32>
    %cst_16 = arith.constant dense<0xFF800000> : vector<80xf32>
    %27 = vector.multi_reduction <maximumf>, %26, %cst_16 [1] : vector<80x128xf32> to vector<80xf32>
    %28 = vector.shape_cast %27 : vector<80xf32> to vector<80x1xf32>
    %29 = vector.broadcast %28 : vector<80x1xf32> to vector<80x128xf32>
    %30 = arith.subf %26, %29 : vector<80x128xf32>
    %31 = math.exp %30 : vector<80x128xf32>
    %cst_17 = arith.constant dense<0.000000e+00> : vector<80xf32>
    %32 = vector.multi_reduction <add>, %31, %cst_17 [1] : vector<80x128xf32> to vector<80xf32>
    %33 = vector.shape_cast %32 : vector<80xf32> to vector<80x1xf32>
    %34 = tpu.reciprocal %33 {approx = true} : vector<80x1xf32> -> vector<80x1xf32>
    %35 = arith.mulf %33, %34 : vector<80x1xf32>
    %cst_18 = arith.constant 2.000000e+00 : f32
    %36 = vector.broadcast %cst_18 : f32 to vector<80x1xf32>
    %37 = arith.subf %36, %35 : vector<80x1xf32>
    %38 = arith.mulf %34, %37 : vector<80x1xf32>
    %39 = vector.broadcast %38 : vector<80x1xf32> to vector<80x128xf32>
    %40 = arith.mulf %31, %39 : vector<80x128xf32>
    %41 = arith.addf %25, %40 : vector<80x128xf32>
    %42 = vector.extract_strided_slice %41 {offsets = [0, 0], sizes = [16, 128], strides = [1, 1]} : vector<80x128xf32> to vector<16x128xf32>
    %43 = vector.extract_strided_slice %41 {offsets = [16, 0], sizes = [16, 128], strides = [1, 1]} : vector<80x128xf32> to vector<16x128xf32>
    %44 = arith.addf %42, %43 : vector<16x128xf32>
    %45 = vector.extract_strided_slice %41 {offsets = [32, 0], sizes = [16, 128], strides = [1, 1]} : vector<80x128xf32> to vector<16x128xf32>
    %46 = arith.addf %44, %45 : vector<16x128xf32>
    %47 = vector.extract_strided_slice %41 {offsets = [48, 0], sizes = [16, 128], strides = [1, 1]} : vector<80x128xf32> to vector<16x128xf32>
    %48 = arith.addf %46, %47 : vector<16x128xf32>
    %49 = vector.extract_strided_slice %41 {offsets = [64, 0], sizes = [16, 128], strides = [1, 1]} : vector<80x128xf32> to vector<16x128xf32>
    %50 = arith.addf %48, %49 : vector<16x128xf32>
    %cst_19 = arith.constant 1.000000e-01 : f32
    %51 = vector.broadcast %cst_19 : f32 to vector<16x128xf32>
    %52 = arith.mulf %50, %51 : vector<16x128xf32>
    %c0_20 = arith.constant 0 : index
    %c0_21 = arith.constant 0 : index
    %53 = vector.load %arg7[%c0_20, %c0_21] : memref<16x128xf32, #tpu.memory_space<vmem>>, vector<16x128xf32>
    tpu.vector_store %arg7[%c0_20, %c0_21], %52 {strides = array<i32>} : memref<16x128xf32, #tpu.memory_space<vmem>>, vector<16x128xf32>,
    return
  }
}

</mosaic_0001>

<llo_original>
// kernel: multi_crop_ensemble.1
$region0: #{multi_crop_ensemble.1}
  #allocation0 [shape = 'u32[]', space=smem, size = 0x4, offset = 0x4, fixed_abs, tag = 'smem constant byte address 0x4 - core index']
  #allocation1 [shape = 'u32[144,128]{1,0:T(1,128)}', space=vmem, size = 0x12000, scoped, tag = 'internal scratch']
  %s0 = inlined_call_operand.vmem [shape: bf16[16,256], index: 0, kind: input, shape index: {}]
  %s1 = inlined_call_operand.vmem [shape: bf16[16,256], index: 1, kind: input, shape index: {}]
  %s2 = inlined_call_operand.vmem [shape: bf16[16,256], index: 2, kind: input, shape index: {}]
  %s3 = inlined_call_operand.vmem [shape: bf16[16,256], index: 3, kind: input, shape index: {}]
  %s4 = inlined_call_operand.vmem [shape: bf16[16,256], index: 4, kind: input, shape index: {}]
  %s5 = inlined_call_operand.vmem [shape: bf16[256,256], index: 5, kind: input, shape index: {}]
  %s6 = inlined_call_operand.vmem [shape: f32[1,256], index: 6, kind: input, shape index: {}]
  %s7 = inlined_call_operand.vmem [shape: f32[16,128], index: 7, kind: output, shape index: {}]
  %s8 = sld [smem:[#allocation0]]
  $region38: #{multi_crop_ensemble.1} parent=0
    _
  %s10 = ssub.s32 1, %s8
  %s11 = scalar_select 0, %s10, %s8
  // Predicated region
  $region2: #{multi_crop_ensemble.1} parent=0 // pred_check
    _
  $region3: #{multi_crop_ensemble.1} parent=0 // pred_check_branch
    %13 = sbr.rel (0) target = $region5
  $region4: #{multi_crop_ensemble.1} parent=0 // pred_region
    _
  $region5: #{multi_crop_ensemble.1} parent=0 // pred_fallthru
    _
  // Predicated region
  $region6: #{multi_crop_ensemble.1} parent=0 // pred_check
    _
  $region7: #{multi_crop_ensemble.1} parent=0 // pred_check_branch
    %15 = sbr.rel (0) target = $region9
  $region8: #{multi_crop_ensemble.1} parent=0 // pred_region
    _
  $region9: #{multi_crop_ensemble.1} parent=0 // pred_fallthru
    _
  // Predicated region
  $region10: #{multi_crop_ensemble.1} parent=0 // pred_check
    _
  $region11: #{multi_crop_ensemble.1} parent=0 // pred_check_branch
    %17 = sbr.rel (0) target = $region13
  $region12: #{multi_crop_ensemble.1} parent=0 // pred_region
    _
  $region13: #{multi_crop_ensemble.1} parent=0 // pred_fallthru
    _
  // Predicated region
  $region14: #{multi_crop_ensemble.1} parent=0 // pred_check
    _
  $region15: #{multi_crop_ensemble.1} parent=0 // pred_check_branch
    %19 = sbr.rel (0) target = $region17
  $region16: #{multi_crop_ensemble.1} parent=0 // pred_region
    _
  $region17: #{multi_crop_ensemble.1} parent=0 // pred_fallthru
    _
  // Predicated region
  $region18: #{multi_crop_ensemble.1} parent=0 // pred_check
    _
  $region19: #{multi_crop_ensemble.1} parent=0 // pred_check_branch
    %21 = sbr.rel (0) target = $region21
  $region20: #{multi_crop_ensemble.1} parent=0 // pred_region
    _
  $region21: #{multi_crop_ensemble.1} parent=0 // pred_fallthru
    _
  // Predicated region
  $region22: #{multi_crop_ensemble.1} parent=0 // pred_check
    _
  $region23: #{multi_crop_ensemble.1} parent=0 // pred_check_branch
    %23 = sbr.rel (0) target = $region25
  $region24: #{multi_crop_ensemble.1} parent=0 // pred_region
    _
  $region25: #{multi_crop_ensemble.1} parent=0 // pred_fallthru
    _
  // Predicated region
  $region26: #{multi_crop_ensemble.1} parent=0 // pred_check
    _
  $region27: #{multi_crop_ensemble.1} parent=0 // pred_check_branch
    %25 = sbr.rel (0) target = $region29
  $region28: #{multi_crop_ensemble.1} parent=0 // pred_region
    _
  $region29: #{multi_crop_ensemble.1} parent=0 // pred_fallthru
    _
  %v26 = vld [vmem:[%s0] sm:$0xff]
  %v27 = vld [vmem:[%s0 + $0x8] sm:$0xff]
  %v28 = vld [vmem:[%s1] sm:$0xff]
  %v29 = vld [vmem:[%s1 + $0x8] sm:$0xff]
  %v30 = vld [vmem:[%s2] sm:$0xff]
  %v31 = vld [vmem:[%s2 + $0x8] sm:$0xff]
  %v32 = vld [vmem:[%s3] sm:$0xff]
  %v33 = vld [vmem:[%s3 + $0x8] sm:$0xff]
  %v34 = vld [vmem:[%s4] sm:$0xff]
  %v35 = vld [vmem:[%s4 + $0x8] sm:$0xff]
  %v38 = vunpack.c.l.b16 %v26
  %v39 = vunpack.c.h.b16 %v26
  %v40 = vunpack.c.l.b16 %v27
  %v41 = vunpack.c.h.b16 %v27
  %v42 = vpack.c.b16 %v40, %v38
  %v43 = vpack.c.b16 %v41, %v39
  %v48 = vunpack.c.l.b16 %v28
  %v49 = vunpack.c.h.b16 %v28
  %v50 = vunpack.c.l.b16 %v29
  %v51 = vunpack.c.h.b16 %v29
  %v52 = vpack.c.b16 %v50, %v48
  %v53 = vpack.c.b16 %v51, %v49
  %v58 = vunpack.c.l.b16 %v30
  %v59 = vunpack.c.h.b16 %v30
  %v60 = vunpack.c.l.b16 %v31
  %v61 = vunpack.c.h.b16 %v31
  %v62 = vpack.c.b16 %v60, %v58
  %v63 = vpack.c.b16 %v61, %v59
  %v68 = vunpack.c.l.b16 %v32
  %v69 = vunpack.c.h.b16 %v32
  %v70 = vunpack.c.l.b16 %v33
  %v71 = vunpack.c.h.b16 %v33
  %v72 = vpack.c.b16 %v70, %v68
  %v73 = vpack.c.b16 %v71, %v69
  %v78 = vunpack.c.l.b16 %v34
  %v79 = vunpack.c.h.b16 %v34
  %v80 = vunpack.c.l.b16 %v35
  %v81 = vunpack.c.h.b16 %v35
  %v82 = vpack.c.b16 %v80, %v78
  %v83 = vpack.c.b16 %v81, %v79
  %v86 = vld [vmem:[%s5] sm:$0xff]
  %v87 = vld [vmem:[%s5 + $0x8] sm:$0xff]
  %v88 = vld [vmem:[%s5 + $0x10] sm:$0xff]
  %v89 = vld [vmem:[%s5 + $0x18] sm:$0xff]
  %v90 = vld [vmem:[%s5 + $0x20] sm:$0xff]
  %v91 = vld [vmem:[%s5 + $0x28] sm:$0xff]
  %v92 = vld [vmem:[%s5 + $0x30] sm:$0xff]
  %v93 = vld [vmem:[%s5 + $0x38] sm:$0xff]
  %v94 = vld [vmem:[%s5 + $0x40] sm:$0xff]
  %v95 = vld [vmem:[%s5 + $0x48] sm:$0xff]
  %v96 = vld [vmem:[%s5 + $0x50] sm:$0xff]
  %v97 = vld [vmem:[%s5 + $0x58] sm:$0xff]
  %v98 = vld [vmem:[%s5 + $0x60] sm:$0xff]
  %v99 = vld [vmem:[%s5 + $0x68] sm:$0xff]
  %v100 = vld [vmem:[%s5 + $0x70] sm:$0xff]
  %v101 = vld [vmem:[%s5 + $0x78] sm:$0xff]
  %v102 = vld [vmem:[%s5 + $0x80] sm:$0xff]
  %v103 = vld [vmem:[%s5 + $0x88] sm:$0xff]
  %v104 = vld [vmem:[%s5 + $0x90] sm:$0xff]
  %v105 = vld [vmem:[%s5 + $0x98] sm:$0xff]
  %v106 = vld [vmem:[%s5 + $0xa0] sm:$0xff]
  %v107 = vld [vmem:[%s5 + $0xa8] sm:$0xff]
  %v108 = vld [vmem:[%s5 + $0xb0] sm:$0xff]
  %v109 = vld [vmem:[%s5 + $0xb8] sm:$0xff]
  %v110 = vld [vmem:[%s5 + $0xc0] sm:$0xff]
  %v111 = vld [vmem:[%s5 + $0xc8] sm:$0xff]
  %v112 = vld [vmem:[%s5 + $0xd0] sm:$0xff]
  %v113 = vld [vmem:[%s5 + $0xd8] sm:$0xff]
  %v114 = vld [vmem:[%s5 + $0xe0] sm:$0xff]
  %v115 = vld [vmem:[%s5 + $0xe8] sm:$0xff]
  %v116 = vld [vmem:[%s5 + $0xf0] sm:$0xff]
  %v117 = vld [vmem:[%s5 + $0xf8] sm:$0xff]
  %v118 = vld [vmem:[%s6] sm:$0x3]
  %v120 = vlaneseq
  %v121 = vshrl.u32 %v120, 7
  %v122 = vsub.s32 0, %v121
  %v123 = vrot.slane %v118, %v122
  %v124 = vlaneseq
  %v125 = vshrl.u32 %v124, 7
  %v126 = vsub.s32 1, %v125
  %v127 = vrot.slane %v118, %v126
  %v162 = vunpack.c.l.b16 %v86
  %v163 = vunpack.c.h.b16 %v86
  %v164 = vunpack.c.l.b16 %v87
  %v165 = vunpack.c.h.b16 %v87
  %v166 = vunpack.c.l.b16 %v88
  %v167 = vunpack.c.h.b16 %v88
  %v168 = vunpack.c.l.b16 %v89
  %v169 = vunpack.c.h.b16 %v89
  %v170 = vunpack.c.l.b16 %v90
  %v171 = vunpack.c.h.b16 %v90
  %v172 = vunpack.c.l.b16 %v91
  %v173 = vunpack.c.h.b16 %v91
  %v174 = vunpack.c.l.b16 %v92
  %v175 = vunpack.c.h.b16 %v92
  %v176 = vunpack.c.l.b16 %v93
  %v177 = vunpack.c.h.b16 %v93
  %v178 = vunpack.c.l.b16 %v94
  %v179 = vunpack.c.h.b16 %v94
  %v180 = vunpack.c.l.b16 %v95
  %v181 = vunpack.c.h.b16 %v95
  %v182 = vunpack.c.l.b16 %v96
  %v183 = vunpack.c.h.b16 %v96
  %v184 = vunpack.c.l.b16 %v97
  %v185 = vunpack.c.h.b16 %v97
  %v186 = vunpack.c.l.b16 %v98
  %v187 = vunpack.c.h.b16 %v98
  %v188 = vunpack.c.l.b16 %v99
  %v189 = vunpack.c.h.b16 %v99
  %v190 = vunpack.c.l.b16 %v100
  %v191 = vunpack.c.h.b16 %v100
  %v192 = vunpack.c.l.b16 %v101
  %v193 = vunpack.c.h.b16 %v101
  %v194 = vunpack.c.l.b16 %v102
  %v195 = vunpack.c.h.b16 %v102
  %v196 = vunpack.c.l.b16 %v103
  %v197 = vunpack.c.h.b16 %v103
  %v198 = vunpack.c.l.b16 %v104
  %v199 = vunpack.c.h.b16 %v104
  %v200 = vunpack.c.l.b16 %v105
  %v201 = vunpack.c.h.b16 %v105
  %v202 = vunpack.c.l.b16 %v106
  %v203 = vunpack.c.h.b16 %v106
  %v204 = vunpack.c.l.b16 %v107
  %v205 = vunpack.c.h.b16 %v107
  %v206 = vunpack.c.l.b16 %v108
  %v207 = vunpack.c.h.b16 %v108
  %v208 = vunpack.c.l.b16 %v109
  %v209 = vunpack.c.h.b16 %v109
  %v210 = vunpack.c.l.b16 %v110
  %v211 = vunpack.c.h.b16 %v110
  %v212 = vunpack.c.l.b16 %v111
  %v213 = vunpack.c.h.b16 %v111
  %v214 = vunpack.c.l.b16 %v112
  %v215 = vunpack.c.h.b16 %v112
  %v216 = vunpack.c.l.b16 %v113
  %v217 = vunpack.c.h.b16 %v113
  %v218 = vunpack.c.l.b16 %v114
  %v219 = vunpack.c.h.b16 %v114
  %v220 = vunpack.c.l.b16 %v115
  %v221 = vunpack.c.h.b16 %v115
  %v222 = vunpack.c.l.b16 %v116
  %v223 = vunpack.c.h.b16 %v116
  %v224 = vunpack.c.l.b16 %v117
  %v225 = vunpack.c.h.b16 %v117
  %v226 = vpack.c.b16 %v164, %v162
  %v227 = vpack.c.b16 %v165, %v163
  %v228 = vpack.c.b16 %v168, %v166
  %v229 = vpack.c.b16 %v169, %v167
  %v230 = vpack.c.b16 %v172, %v170
  %v231 = vpack.c.b16 %v173, %v171
  %v232 = vpack.c.b16 %v176, %v174
  %v233 = vpack.c.b16 %v177, %v175
  %v234 = vpack.c.b16 %v180, %v178
  %v235 = vpack.c.b16 %v181, %v179
  %v236 = vpack.c.b16 %v184, %v182
  %v237 = vpack.c.b16 %v185, %v183
  %v238 = vpack.c.b16 %v188, %v186
  %v239 = vpack.c.b16 %v189, %v187
  %v240 = vpack.c.b16 %v192, %v190
  %v241 = vpack.c.b16 %v193, %v191
  %v242 = vpack.c.b16 %v196, %v194
  %v243 = vpack.c.b16 %v197, %v195
  %v244 = vpack.c.b16 %v200, %v198
  %v245 = vpack.c.b16 %v201, %v199
  %v246 = vpack.c.b16 %v204, %v202
  %v247 = vpack.c.b16 %v205, %v203
  %v248 = vpack.c.b16 %v208, %v206
  %v249 = vpack.c.b16 %v209, %v207
  %v250 = vpack.c.b16 %v212, %v210
  %v251 = vpack.c.b16 %v213, %v211
  %v252 = vpack.c.b16 %v216, %v214
  %v253 = vpack.c.b16 %v217, %v215
  %v254 = vpack.c.b16 %v220, %v218
  %v255 = vpack.c.b16 %v221, %v219
  %v256 = vpack.c.b16 %v224, %v222
  %v257 = vpack.c.b16 %v225, %v223
  %290 = vmatprep.subr.bf16.mxu0 %v227
  %291 = vmatpush1.bf16.msra.mxu0 %v226
  %292 = vmatprep.subr.bf16.mxu0 %v229
  %293 = vmatpush1.bf16.msra.mxu0 %v228
  %294 = vmatprep.subr.bf16.mxu0 %v231
  %295 = vmatpush1.bf16.msra.mxu0 %v230
  %296 = vmatprep.subr.bf16.mxu0 %v233
  %297 = vmatpush1.bf16.msra.mxu0 %v232
  %298 = vmatprep.subr.bf16.mxu0 %v235
  %299 = vmatpush1.bf16.msra.mxu0 %v234
  %300 = vmatprep.subr.bf16.mxu0 %v237
  %301 = vmatpush1.bf16.msra.mxu0 %v236
  %302 = vmatprep.subr.bf16.mxu0 %v239
  %303 = vmatpush1.bf16.msra.mxu0 %v238
  %304 = vmatprep.subr.bf16.mxu0 %v241
  %305 = vmatpush1.bf16.msra.mxu0 %v240
  %306 = vmatprep.subr.bf16.mxu0 %v243
  %307 = vmatpush1.bf16.msra.mxu0 %v242
  %308 = vmatprep.subr.bf16.mxu0 %v245
  %309 = vmatpush1.bf16.msra.mxu0 %v244
  %310 = vmatprep.subr.bf16.mxu0 %v247
  %311 = vmatpush1.bf16.msra.mxu0 %v246
  %312 = vmatprep.subr.bf16.mxu0 %v249
  %313 = vmatpush1.bf16.msra.mxu0 %v248
  %314 = vmatprep.subr.bf16.mxu0 %v251
  %315 = vmatpush1.bf16.msra.mxu0 %v250
  %316 = vmatprep.subr.bf16.mxu0 %v253
  %317 = vmatpush1.bf16.msra.mxu0 %v252
  %318 = vmatprep.subr.bf16.mxu0 %v255
  %319 = vmatpush1.bf16.msra.mxu0 %v254
  %320 = vmatprep.subr.bf16.mxu0 %v257
  %321 = vmatpush1.bf16.msra.mxu0 %v256
  %322 = vmatprep.mubr.bf16.mxu0 %v43
  %323 = vmatmul.mubr.bf16.gmra.mrb[0].mxu0 %v42
  %v324 = vpop.f32.mrb[0].mxu0
  %v325 = vadd.f32 %v123, %v324
  %v326 = vpop.f32.mrb[0].mxu0
  %v327 = vadd.f32 %v127, %v326
  %v328 = vpop.f32.mrb[0].mxu0
  %v329 = vadd.f32 %v123, %v328
  %v330 = vpop.f32.mrb[0].mxu0
  %v331 = vadd.f32 %v127, %v330
  %332 = vmatprep.mubr.bf16.mxu0 %v53
  %333 = vmatmul.mubr.bf16.gmra.mrb[0].mxu0 %v52
  %v334 = vpop.f32.mrb[0].mxu0
  %v335 = vadd.f32 %v123, %v334
  %v336 = vpop.f32.mrb[0].mxu0
  %v337 = vadd.f32 %v127, %v336
  %v338 = vpop.f32.mrb[0].mxu0
  %v339 = vadd.f32 %v123, %v338
  %v340 = vpop.f32.mrb[0].mxu0
  %v341 = vadd.f32 %v127, %v340
  %342 = vmatprep.mubr.bf16.mxu0 %v63
  %343 = vmatmul.mubr.bf16.gmra.mrb[0].mxu0 %v62
  %v344 = vpop.f32.mrb[0].mxu0
  %v345 = vadd.f32 %v123, %v344
  %v346 = vpop.f32.mrb[0].mxu0
  %v347 = vadd.f32 %v127, %v346
  %v348 = vpop.f32.mrb[0].mxu0
  %v349 = vadd.f32 %v123, %v348
  %v350 = vpop.f32.mrb[0].mxu0
  %v351 = vadd.f32 %v127, %v350
  %352 = vmatprep.mubr.bf16.mxu0 %v73
  %353 = vmatmul.mubr.bf16.gmra.mrb[0].mxu0 %v72
  %v354 = vpop.f32.mrb[0].mxu0
  %v355 = vadd.f32 %v123, %v354
  %v356 = vpop.f32.mrb[0].mxu0
  %v357 = vadd.f32 %v127, %v356
  %v358 = vpop.f32.mrb[0].mxu0
  %v359 = vadd.f32 %v123, %v358
  %v360 = vpop.f32.mrb[0].mxu0
  %v361 = vadd.f32 %v127, %v360
  %362 = vmatprep.mubr.bf16.mxu0 %v83
  %363 = vmatmul.mubr.bf16.gmra.mrb[0].mxu0 %v82
  %v364 = vpop.f32.mrb[0].mxu0
  %v365 = vadd.f32 %v123, %v364
  %v366 = vpop.f32.mrb[0].mxu0
  %v367 = vadd.f32 %v127, %v366
  %v368 = vpop.f32.mrb[0].mxu0
  %v369 = vadd.f32 %v123, %v368
  %v370 = vpop.f32.mrb[0].mxu0
  %v371 = vadd.f32 %v127, %v370
  %372 = vdwg.mxu0
  %373 = vmax.xlane.f32.xlu0 %v325
  %v374 = vpop.xlane.xlu0 %373
  %375 = vmax.xlane.f32.xlu0 %v329
  %v376 = vpop.xlane.xlu0 %375
  %377 = vmax.xlane.f32.xlu0 %v335
  %v378 = vpop.xlane.xlu0 %377
  %379 = vmax.xlane.f32.xlu0 %v339
  %v380 = vpop.xlane.xlu0 %379
  %381 = vmax.xlane.f32.xlu0 %v345
  %v382 = vpop.xlane.xlu0 %381
  %383 = vmax.xlane.f32.xlu0 %v349
  %v384 = vpop.xlane.xlu0 %383
  %385 = vmax.xlane.f32.xlu0 %v355
  %v386 = vpop.xlane.xlu0 %385
  %387 = vmax.xlane.f32.xlu0 %v359
  %v388 = vpop.xlane.xlu0 %387
  %389 = vmax.xlane.f32.xlu0 %v365
  %v390 = vpop.xlane.xlu0 %389
  %391 = vmax.xlane.f32.xlu0 %v369
  %v392 = vpop.xlane.xlu0 %391
  %v393 = vsub.f32 %v325, %v374
  %v394 = vsub.f32 %v329, %v376
  %v395 = vsub.f32 %v335, %v378
  %v396 = vsub.f32 %v339, %v380
  %v397 = vsub.f32 %v345, %v382
  %v398 = vsub.f32 %v349, %v384
  %v399 = vsub.f32 %v355, %v386
  %v400 = vsub.f32 %v359, %v388
  %v401 = vsub.f32 %v365, %v390
  %v402 = vsub.f32 %v369, %v392
  %v403 = vmul.f32 %v393, 1.442695
  %v404 = vpow.pop %v403
  %v405 = vmul.f32 %v394, 1.442695
  %v406 = vpow.pop %v405
  %v407 = vmul.f32 %v395, 1.442695
  %v408 = vpow.pop %v407
  %v409 = vmul.f32 %v396, 1.442695
  %v410 = vpow.pop %v409
  %v411 = vmul.f32 %v397, 1.442695
  %v412 = vpow.pop %v411
  %v413 = vmul.f32 %v398, 1.442695
  %v414 = vpow.pop %v413
  %v415 = vmul.f32 %v399, 1.442695
  %v416 = vpow.pop %v415
  %v417 = vmul.f32 %v400, 1.442695
  %v418 = vpow.pop %v417
  %v419 = vmul.f32 %v401, 1.442695
  %v420 = vpow.pop %v419
  %v421 = vmul.f32 %v402, 1.442695
  %v422 = vpow.pop %v421
  %423 = vadd.xlane.f32.xlu0 %v404
  %v424 = vpop.xlane.xlu0 %423
  %425 = vadd.xlane.f32.xlu0 %v406
  %v426 = vpop.xlane.xlu0 %425
  %427 = vadd.xlane.f32.xlu0 %v408
  %v428 = vpop.xlane.xlu0 %427
  %429 = vadd.xlane.f32.xlu0 %v410
  %v430 = vpop.xlane.xlu0 %429
  %431 = vadd.xlane.f32.xlu0 %v412
  %v432 = vpop.xlane.xlu0 %431
  %433 = vadd.xlane.f32.xlu0 %v414
  %v434 = vpop.xlane.xlu0 %433
  %435 = vadd.xlane.f32.xlu0 %v416
  %v436 = vpop.xlane.xlu0 %435
  %437 = vadd.xlane.f32.xlu0 %v418
  %v438 = vpop.xlane.xlu0 %437
  %439 = vadd.xlane.f32.xlu0 %v420
  %v440 = vpop.xlane.xlu0 %439
  %441 = vadd.xlane.f32.xlu0 %v422
  %v442 = vpop.xlane.xlu0 %441
  %v443 = vrcp.pop %v424
  %v444 = vrcp.pop %v426
  %v445 = vrcp.pop %v428
  %v446 = vrcp.pop %v430
  %v447 = vrcp.pop %v432
  %v448 = vrcp.pop %v434
  %v449 = vrcp.pop %v436
  %v450 = vrcp.pop %v438
  %v451 = vrcp.pop %v440
  %v452 = vrcp.pop %v442
  %v453 = vmul.f32 %v424, %v443
  %v454 = vmul.f32 %v426, %v444
  %v455 = vmul.f32 %v428, %v445
  %v456 = vmul.f32 %v430, %v446
  %v457 = vmul.f32 %v432, %v447
  %v458 = vmul.f32 %v434, %v448
  %v459 = vmul.f32 %v436, %v449
  %v460 = vmul.f32 %v438, %v450
  %v461 = vmul.f32 %v440, %v451
  %v462 = vmul.f32 %v442, %v452
  %v463 = vsub.f32 2.0, %v453
  %v464 = vsub.f32 2.0, %v454
  %v465 = vsub.f32 2.0, %v455
  %v466 = vsub.f32 2.0, %v456
  %v467 = vsub.f32 2.0, %v457
  %v468 = vsub.f32 2.0, %v458
  %v469 = vsub.f32 2.0, %v459
  %v470 = vsub.f32 2.0, %v460
  %v471 = vsub.f32 2.0, %v461
  %v472 = vsub.f32 2.0, %v462
  %v473 = vmul.f32 %v443, %v463
  %v474 = vmul.f32 %v444, %v464
  %v475 = vmul.f32 %v445, %v465
  %v476 = vmul.f32 %v446, %v466
  %v477 = vmul.f32 %v447, %v467
  %v478 = vmul.f32 %v448, %v468
  %v479 = vmul.f32 %v449, %v469
  %v480 = vmul.f32 %v450, %v470
  %v481 = vmul.f32 %v451, %v471
  %v482 = vmul.f32 %v452, %v472
  %v483 = vmul.f32 %v404, %v473
  %v484 = vmul.f32 %v406, %v474
  %v485 = vmul.f32 %v408, %v475
  %v486 = vmul.f32 %v410, %v476
  %v487 = vmul.f32 %v412, %v477
  %v488 = vmul.f32 %v414, %v478
  %v489 = vmul.f32 %v416, %v479
  %v490 = vmul.f32 %v418, %v480
  %v491 = vmul.f32 %v420, %v481
  %v492 = vmul.f32 %v422, %v482
  %493 = vmax.xlane.f32.xlu0 %v327
  %v494 = vpop.xlane.xlu0 %493
  %495 = vmax.xlane.f32.xlu0 %v331
  %v496 = vpop.xlane.xlu0 %495
  %497 = vmax.xlane.f32.xlu0 %v337
  %v498 = vpop.xlane.xlu0 %497
  %499 = vmax.xlane.f32.xlu0 %v341
  %v500 = vpop.xlane.xlu0 %499
  %501 = vmax.xlane.f32.xlu0 %v347
  %v502 = vpop.xlane.xlu0 %501
  %503 = vmax.xlane.f32.xlu0 %v351
  %v504 = vpop.xlane.xlu0 %503
  %505 = vmax.xlane.f32.xlu0 %v357
  %v506 = vpop.xlane.xlu0 %505
  %507 = vmax.xlane.f32.xlu0 %v361
  %v508 = vpop.xlane.xlu0 %507
  %509 = vmax.xlane.f32.xlu0 %v367
  %v510 = vpop.xlane.xlu0 %509
  %511 = vmax.xlane.f32.xlu0 %v371
  %v512 = vpop.xlane.xlu0 %511
  %v513 = vsub.f32 %v327, %v494
  %v514 = vsub.f32 %v331, %v496
  %v515 = vsub.f32 %v337, %v498
  %v516 = vsub.f32 %v341, %v500
  %v517 = vsub.f32 %v347, %v502
  %v518 = vsub.f32 %v351, %v504
  %v519 = vsub.f32 %v357, %v506
  %v520 = vsub.f32 %v361, %v508
  %v521 = vsub.f32 %v367, %v510
  %v522 = vsub.f32 %v371, %v512
  %v523 = vmul.f32 %v513, 1.442695
  %v524 = vpow.pop %v523
  %v525 = vmul.f32 %v514, 1.442695
  %v526 = vpow.pop %v525
  %v527 = vmul.f32 %v515, 1.442695
  %v528 = vpow.pop %v527
  %v529 = vmul.f32 %v516, 1.442695
  %v530 = vpow.pop %v529
  %v531 = vmul.f32 %v517, 1.442695
  %v532 = vpow.pop %v531
  %v533 = vmul.f32 %v518, 1.442695
  %v534 = vpow.pop %v533
  %v535 = vmul.f32 %v519, 1.442695
  %v536 = vpow.pop %v535
  %v537 = vmul.f32 %v520, 1.442695
  %v538 = vpow.pop %v537
  %v539 = vmul.f32 %v521, 1.442695
  %v540 = vpow.pop %v539
  %v541 = vmul.f32 %v522, 1.442695
  %v542 = vpow.pop %v541
  %543 = vadd.xlane.f32.xlu0 %v524
  %v544 = vpop.xlane.xlu0 %543
  %545 = vadd.xlane.f32.xlu0 %v526
  %v546 = vpop.xlane.xlu0 %545
  %547 = vadd.xlane.f32.xlu0 %v528
  %v548 = vpop.xlane.xlu0 %547
  %549 = vadd.xlane.f32.xlu0 %v530
  %v550 = vpop.xlane.xlu0 %549
  %551 = vadd.xlane.f32.xlu0 %v532
  %v552 = vpop.xlane.xlu0 %551
  %553 = vadd.xlane.f32.xlu0 %v534
  %v554 = vpop.xlane.xlu0 %553
  %555 = vadd.xlane.f32.xlu0 %v536
  %v556 = vpop.xlane.xlu0 %555
  %557 = vadd.xlane.f32.xlu0 %v538
  %v558 = vpop.xlane.xlu0 %557
  %559 = vadd.xlane.f32.xlu0 %v540
  %v560 = vpop.xlane.xlu0 %559
  %561 = vadd.xlane.f32.xlu0 %v542
  %v562 = vpop.xlane.xlu0 %561
  %v563 = vrcp.pop %v544
  %v564 = vrcp.pop %v546
  %v565 = vrcp.pop %v548
  %v566 = vrcp.pop %v550
  %v567 = vrcp.pop %v552
  %v568 = vrcp.pop %v554
  %v569 = vrcp.pop %v556
  %v570 = vrcp.pop %v558
  %v571 = vrcp.pop %v560
  %v572 = vrcp.pop %v562
  %v573 = vmul.f32 %v544, %v563
  %v574 = vmul.f32 %v546, %v564
  %v575 = vmul.f32 %v548, %v565
  %v576 = vmul.f32 %v550, %v566
  %v577 = vmul.f32 %v552, %v567
  %v578 = vmul.f32 %v554, %v568
  %v579 = vmul.f32 %v556, %v569
  %v580 = vmul.f32 %v558, %v570
  %v581 = vmul.f32 %v560, %v571
  %v582 = vmul.f32 %v562, %v572
  %v583 = vsub.f32 2.0, %v573
  %v584 = vsub.f32 2.0, %v574
  %v585 = vsub.f32 2.0, %v575
  %v586 = vsub.f32 2.0, %v576
  %v587 = vsub.f32 2.0, %v577
  %v588 = vsub.f32 2.0, %v578
  %v589 = vsub.f32 2.0, %v579
  %v590 = vsub.f32 2.0, %v580
  %v591 = vsub.f32 2.0, %v581
  %v592 = vsub.f32 2.0, %v582
  %v593 = vmul.f32 %v563, %v583
  %v594 = vmul.f32 %v564, %v584
  %v595 = vmul.f32 %v565, %v585
  %v596 = vmul.f32 %v566, %v586
  %v597 = vmul.f32 %v567, %v587
  %v598 = vmul.f32 %v568, %v588
  %v599 = vmul.f32 %v569, %v589
  %v600 = vmul.f32 %v570, %v590
  %v601 = vmul.f32 %v571, %v591
  %v602 = vmul.f32 %v572, %v592
  %v603 = vmul.f32 %v524, %v593
  %v604 = vmul.f32 %v526, %v594
  %v605 = vmul.f32 %v528, %v595
  %v606 = vmul.f32 %v530, %v596
  %v607 = vmul.f32 %v532, %v597
  %v608 = vmul.f32 %v534, %v598
  %v609 = vmul.f32 %v536, %v599
  %v610 = vmul.f32 %v538, %v600
  %v611 = vmul.f32 %v540, %v601
  %v612 = vmul.f32 %v542, %v602
  %v613 = vadd.f32 %v483, %v603
  %v614 = vadd.f32 %v484, %v604
  %v615 = vadd.f32 %v485, %v605
  %v616 = vadd.f32 %v486, %v606
  %v617 = vadd.f32 %v487, %v607
  %v618 = vadd.f32 %v488, %v608
  %v619 = vadd.f32 %v489, %v609
  %v620 = vadd.f32 %v490, %v610
  %v621 = vadd.f32 %v491, %v611
  %v622 = vadd.f32 %v492, %v612
  %v623 = vadd.f32 %v613, %v615
  %v624 = vadd.f32 %v614, %v616
  %v625 = vadd.f32 %v623, %v617
  %v626 = vadd.f32 %v624, %v618
  %v627 = vadd.f32 %v625, %v619
  %v628 = vadd.f32 %v626, %v620
  %v629 = vadd.f32 %v627, %v621
  %v630 = vadd.f32 %v628, %v622
  %v631 = vmul.f32 %v629, 0.1
  %v632 = vmul.f32 %v630, 0.1
  %633 = vst [vmem:[%s7] sm:$0xff] %v631
  %634 = vst [vmem:[%s7 + $0x8] sm:$0xff] %v632
  // Predicated region
  $region30: #{multi_crop_ensemble.1} parent=0 // pred_check
    _
  $region31: #{multi_crop_ensemble.1} parent=0 // pred_check_branch
    %636 = sbr.rel (0) target = $region33
  $region32: #{multi_crop_ensemble.1} parent=0 // pred_region
    _
  $region33: #{multi_crop_ensemble.1} parent=0 // pred_fallthru
    _
  // Predicated region
  $region34: #{multi_crop_ensemble.1} parent=0 // pred_check
    _
  $region35: #{multi_crop_ensemble.1} parent=0 // pred_check_branch
    %638 = sbr.rel (0) target = $region37
  $region36: #{multi_crop_ensemble.1} parent=0 // pred_region
    _
  $region37: #{multi_crop_ensemble.1} parent=0 // pred_fallthru
    _

</llo_original>
